<compile_context>
chip_gen: v6e
topology: v6e:2x2x1
jax: 0.10.0
libtpu: 0.0.40
codegen_flags: <defaults>
</compile_context>

<pallas_src>
import functools
import math

import jax
import jax.numpy as jnp
from jax.experimental import pallas as pl
from jax.experimental.pallas import tpu as pltpu

VERY_NEG_NUMBER = -100000000000.0

_LANE = 128
_SUBLANE = 8
_ENC_TILE_BUDGET = 4 * 1024 * 1024   # per-buffer encoder tile (VMEM-padded bytes)
_MIN_GRID_STEPS = 4                  # keep the DMA pipeline / both v7x TCs busy
_VMEM_LIMIT = 32 * 1024 * 1024       # raises v5e scoped default; no-op on v6e/v7x


def _round_up(x, m):
    return -(-x // m) * m


def _attn_kernel(enc_ref, mask_ref, hb_ref, ue_ref, out_ref, *,
                 use_mxu, fused_softmax):
    f32 = jnp.float32
    enc = enc_ref[...].astype(f32)       # (tb, tml, d) widen in VMEM (bf16-safe)
    mask = mask_ref[...]                 # (tb, tml)    lane-dense
    hb = hb_ref[...]                     # (tb, 1)      hidden·u_h + bias·v
    ue = ue_ref[...]                     # (1, 8, d)    u_e replicated over 8 sublanes

    if use_mxu:
        # Route the d-contraction through the otherwise-idle MXU so the
        # cross-lane reduce does not saturate the 2 XLU units at v7x/v6e
        # HBM arrival rates (batched dot_general, flash-attention pattern).
        ue_b = jnp.broadcast_to(ue, (enc.shape[0], _SUBLANE, enc.shape[2]))
        s = jax.lax.dot_general(
            ue_b, enc,
            dimension_numbers=(((2,), (2,)), ((0,), (0,))),
            preferred_element_type=f32)                     # (tb, 8, tml)
        score = s[:, 0, :]                                  # (tb, tml)
    else:
        # VPU multiply + XLU lane-reduce (fine for v5e and for large d).
        score = jnp.sum(enc * ue[:, 0:1, :], axis=-1)       # (tb, tml)

    att = jnp.tanh(score + hb) + (1.0 - mask) * VERY_NEG_NUMBER

    if fused_softmax:
        att = att - jnp.max(att, axis=-1, keepdims=True)
        e = jnp.exp(att)
        out_ref[...] = e / jnp.sum(e, axis=-1, keepdims=True)
    else:
        out_ref[...] = att


def attn_forward(hidden, encoder_outputs, query_mask, weight, bias, v,
                 *, use_mxu=None, force_unfused=False):
    """hidden (B,1,d), encoder_outputs (B,ML,d), query_mask (B,ML,1).
    weight (d, 2d), bias (d,), v (d,)  -- PyTorch nn.Linear layout."""
    B, ML, d = encoder_outputs.shape
    f32 = jnp.float32
    if use_mxu is None:
        # XLU lane-reduce binds for d ~ 128-256 at v7x/v6e HBM rates; tiny d or
        # very large d amortizes.  MXU path is safe everywhere (memory-bound).
        use_mxu = d >= 64

    # ---- parameter-only fold (exact; tanh is applied AFTER the dot with v) ----
    w = weight.astype(f32)
    v32 = v.astype(f32)
    u_h = w[:, :d].T @ v32                         # (d,)  acts on hidden
    u_e = w[:, d:].T @ v32                         # (d,)  acts on encoder_outputs
    c0 = jnp.dot(bias.astype(f32), v32)            # scalar
    # Hidden term folded outside the kernel: tiny (B,d) matvec that XLA fuses.
    h_bias = (hidden.reshape(B, d).astype(f32) @ u_h + c0).reshape(B, 1)
    u_e8 = jnp.broadcast_to(u_e.reshape(1, 1, d), (1, _SUBLANE, d))

    mask2d = query_mask.reshape(B, ML).astype(f32)  # dense (B, ML), no size-1 dim
    enc = encoder_outputs                           # native dtype; widened in-kernel

    itemsize = jnp.dtype(enc.dtype).itemsize
    # VMEM footprint of one batch row of the encoder tile (lane/sublane padded).
    row_bytes = _round_up(ML, _SUBLANE) * _round_up(d, _LANE) * itemsize

    fused = (not force_unfused) and row_bytes * min(_SUBLANE, B) <= _ENC_TILE_BUDGET

    if fused:
        # ---------- fused path: full-ML row per block, softmax in-kernel ----------
        if B <= _SUBLANE:
            tb = B
        else:
            tb = min(B, _ENC_TILE_BUDGET // row_bytes) // _SUBLANE * _SUBLANE
            tb = max(tb, _SUBLANE)
            while tb > _SUBLANE and pl.cdiv(B, tb) < _MIN_GRID_STEPS:
                tb -= _SUBLANE
        grid = (pl.cdiv(B, tb),)
        kernel = functools.partial(_attn_kernel, use_mxu=use_mxu,
                                   fused_softmax=True)
        out2d = pl.pallas_call(
            kernel,
            out_shape=jax.ShapeDtypeStruct((B, ML), f32),
            grid_spec=pltpu.PrefetchScalarGridSpec(
                num_scalar_prefetch=0,
                grid=grid,
                in_specs=[
                    pl.BlockSpec((tb, ML, d), lambda b: (b, 0, 0)),       # encoder
                    pl.BlockSpec((tb, ML), lambda b: (b, 0)),             # mask
                    pl.BlockSpec((tb, 1), lambda b: (b, 0)),              # h_bias
                    pl.BlockSpec((1, _SUBLANE, d), lambda b: (0, 0, 0)),  # u_e
                ],
                out_specs=pl.BlockSpec((tb, ML), lambda b: (b, 0)),
            ),
            compiler_params=pltpu.CompilerParams(
                dimension_semantics=("parallel",),
                vmem_limit_bytes=_VMEM_LIMIT),
        )(enc, mask2d, h_bias, u_e8)
        return out2d.reshape(B, ML, 1)

    # ---------- long-sequence fallback: ML-tiled scores + XLA softmax ----------
    # The kernel emits only the masked tanh energies; softmax over the (B, ML)
    # score array (d-times smaller than enc) is done by XLA in the wrapper, so
    # the extra HBM round trip is negligible and no online softmax is needed.
    tb = B if B <= _SUBLANE else _SUBLANE
    tml = max(_SUBLANE,
              (_ENC_TILE_BUDGET // (tb * _round_up(d, _LANE) * itemsize))
              // _SUBLANE * _SUBLANE)
    if tml >= ML:
        tml = ML
    grid = (pl.cdiv(B, tb), pl.cdiv(ML, tml))
    kernel = functools.partial(_attn_kernel, use_mxu=use_mxu, fused_softmax=False)
    att = pl.pallas_call(
        kernel,
        out_shape=jax.ShapeDtypeStruct((B, ML), f32),
        grid_spec=pltpu.PrefetchScalarGridSpec(
            num_scalar_prefetch=0,
            grid=grid,
            in_specs=[
                pl.BlockSpec((tb, tml, d), lambda b, m: (b, m, 0)),       # encoder
                pl.BlockSpec((tb, tml), lambda b, m: (b, m)),             # mask
                pl.BlockSpec((tb, 1), lambda b, m: (b, 0)),               # h_bias
                pl.BlockSpec((1, _SUBLANE, d), lambda b, m: (0, 0, 0)),   # u_e
            ],
            out_specs=pl.BlockSpec((tb, tml), lambda b, m: (b, m)),
        ),
        compiler_params=pltpu.CompilerParams(
            dimension_semantics=("parallel", "parallel"),
            vmem_limit_bytes=_VMEM_LIMIT),
    )(enc, mask2d, h_bias, u_e8)
    return jax.nn.softmax(att, axis=-1).reshape(B, ML, 1)


def attn_reference(hidden, encoder_outputs, query_mask, weight, bias, v):
    """Pure-JAX reference mirroring the PyTorch forward."""
    B, ML, d = encoder_outputs.shape
    f32 = jnp.float32
    H = jnp.broadcast_to(hidden.astype(f32), (B, ML, d))
    x = jnp.concatenate([H, encoder_outputs.astype(f32)], axis=-1)    # (B, ML, 2d)
    energy = jnp.einsum("bme,de->bmd", x, weight.astype(f32)) + bias.astype(f32)
    score = jnp.einsum("bmd,d->bm", energy, v.astype(f32))[..., None]  # (B, ML, 1)
    att = jnp.tanh(score) + (1.0 - query_mask.astype(f32)) * VERY_NEG_NUMBER
    return jax.nn.softmax(att, axis=1)


if __name__ == "__main__":
    B, ML_Q, d = 2, 8, 32
    key = jax.random.PRNGKey(0)
    k1, k2, k3, k4, k5 = jax.random.split(key, 5)

    hidden = jax.random.normal(k1, (B, 1, d), dtype=jnp.float32)
    encoder_outputs = jax.random.normal(k2, (B, ML_Q, d), dtype=jnp.float32)
    # binary mask: last 2 positions masked out per batch row
    query_mask = jnp.concatenate(
        [jnp.ones((B, ML_Q - 2, 1), jnp.float32),
         jnp.zeros((B, 2, 1), jnp.float32)], axis=1)

    # deterministic parameters (nn.Linear(2d->d) + nn.Parameter(v) shapes)
    stdv_lin = 1.0 / math.sqrt(2 * d)
    weight = jax.random.uniform(k3, (d, 2 * d), jnp.float32, -stdv_lin, stdv_lin)
    bias = jax.random.uniform(k4, (d,), jnp.float32, -stdv_lin, stdv_lin)
    stdv_v = 1.0 / math.sqrt(d)
    v = jax.random.uniform(k5, (d,), jnp.float32, -stdv_v, stdv_v)

    ref = attn_reference(hidden, encoder_outputs, query_mask, weight, bias, v)

    # 1) default path (fused softmax; VPU/XLU contraction since d < 64)
    out = jax.block_until_ready(
        attn_forward(hidden, encoder_outputs, query_mask, weight, bias, v))
    assert out.shape == (B, ML_Q, 1)
    assert jnp.allclose(out, ref, atol=1e-5, rtol=1e-4), "default path mismatch"

    # 2) MXU-routed d-contraction (default for d >= 64; exercised explicitly)
    out_mxu = jax.block_until_ready(
        attn_forward(hidden, encoder_outputs, query_mask, weight, bias, v,
                     use_mxu=True))
    assert jnp.allclose(out_mxu, ref, atol=1e-5, rtol=1e-4), "MXU path mismatch"

    # 3) long-sequence fallback (ML-tiled scores + XLA softmax)
    out_tiled = jax.block_until_ready(
        attn_forward(hidden, encoder_outputs, query_mask, weight, bias, v,
                     force_unfused=True))
    assert jnp.allclose(out_tiled, ref, atol=1e-5, rtol=1e-4), "tiled path mismatch"

    print("KERNEL_OK")
</pallas_src>

<mosaic_0001>
module attributes {stable_mosaic.version = 11 : i64} {
  func.func @_attn_kernel(%arg0: i32, %arg1: memref<2x8x32xf32, #tpu.memory_space<vmem>>, %arg2: memref<2x8xf32, #tpu.memory_space<vmem>>, %arg3: memref<2x1xf32, #tpu.memory_space<vmem>>, %arg4: memref<1x8x32xf32, #tpu.memory_space<vmem>>, %arg5: memref<2x8xf32, #tpu.memory_space<vmem>>) attributes {dimension_semantics = [#tpu.dimension_semantics<parallel>], iteration_bounds = array<i64: 1>, scalar_prefetch = 0 : i64, scratch_operands = 0 : i64, tpu.core_type = #tpu.core_type<tc>, window_params = [{transform_indices = @transform_0, window_bounds = array<i64: 2, 8, 32>}, {transform_indices = @transform_1, window_bounds = array<i64: 2, 8>}, {transform_indices = @transform_2, window_bounds = array<i64: 2, 1>}, {pipeline_mode = #tpu.pipeline_mode<synchronous>, transform_indices = @transform_3, window_bounds = array<i64: 1, 8, 32>}, {transform_indices = @transform_4, window_bounds = array<i64: 2, 8>}]} {
    %c0 = arith.constant 0 : index
    %c0_0 = arith.constant 0 : index
    %c0_1 = arith.constant 0 : index
    %0 = vector.load %arg1[%c0, %c0_0, %c0_1] : memref<2x8x32xf32, #tpu.memory_space<vmem>>, vector<2x8x32xf32>
    %c0_2 = arith.constant 0 : index
    %c0_3 = arith.constant 0 : index
    %1 = vector.load %arg2[%c0_2, %c0_3] : memref<2x8xf32, #tpu.memory_space<vmem>>, vector<2x8xf32>
    %c0_4 = arith.constant 0 : index
    %c0_5 = arith.constant 0 : index
    %2 = vector.load %arg3[%c0_4, %c0_5] : memref<2x1xf32, #tpu.memory_space<vmem>>, vector<2x1xf32>
    %c0_6 = arith.constant 0 : index
    %c0_7 = arith.constant 0 : index
    %c0_8 = arith.constant 0 : index
    %3 = vector.load %arg4[%c0_6, %c0_7, %c0_8] : memref<1x8x32xf32, #tpu.memory_space<vmem>>, vector<1x8x32xf32>
    %4 = vector.extract_strided_slice %3 {offsets = [0, 0, 0], sizes = [1, 1, 32], strides = [1, 1, 1]} : vector<1x8x32xf32> to vector<1x1x32xf32>
    %5 = vector.broadcast %4 : vector<1x1x32xf32> to vector<2x8x32xf32>
    %6 = arith.mulf %0, %5 : vector<2x8x32xf32>
    %cst = arith.constant dense<0.000000e+00> : vector<2x8xf32>
    %7 = vector.multi_reduction <add>, %6, %cst [2] : vector<2x8x32xf32> to vector<2x8xf32>
    %8 = vector.broadcast %2 : vector<2x1xf32> to vector<2x8xf32>
    %9 = arith.addf %7, %8 : vector<2x8xf32>
    %10 = math.tanh %9 : vector<2x8xf32>
    %cst_9 = arith.constant 1.000000e+00 : f32
    %11 = vector.broadcast %cst_9 : f32 to vector<2x8xf32>
    %12 = arith.subf %11, %1 : vector<2x8xf32>
    %cst_10 = arith.constant -9.99999979E+10 : f32
    %13 = vector.broadcast %cst_10 : f32 to vector<2x8xf32>
    %14 = arith.mulf %12, %13 : vector<2x8xf32>
    %15 = arith.addf %10, %14 : vector<2x8xf32>
    %cst_11 = arith.constant dense<0xFF800000> : vector<2xf32>
    %16 = vector.multi_reduction <maximumf>, %15, %cst_11 [1] : vector<2x8xf32> to vector<2xf32>
    %17 = vector.shape_cast %16 : vector<2xf32> to vector<2x1xf32>
    %18 = vector.broadcast %17 : vector<2x1xf32> to vector<2x8xf32>
    %19 = arith.subf %15, %18 : vector<2x8xf32>
    %20 = math.exp %19 : vector<2x8xf32>
    %cst_12 = arith.constant dense<0.000000e+00> : vector<2xf32>
    %21 = vector.multi_reduction <add>, %20, %cst_12 [1] : vector<2x8xf32> to vector<2xf32>
    %22 = vector.shape_cast %21 : vector<2xf32> to vector<2x1xf32>
    %23 = vector.broadcast %22 : vector<2x1xf32> to vector<2x8xf32>
    %24 = arith.divf %20, %23 : vector<2x8xf32>
    %c0_13 = arith.constant 0 : index
    %c0_14 = arith.constant 0 : index
    %25 = vector.load %arg5[%c0_13, %c0_14] : memref<2x8xf32, #tpu.memory_space<vmem>>, vector<2x8xf32>
    tpu.vector_store %arg5[%c0_13, %c0_14], %24 {strides = array<i32>} : memref<2x8xf32, #tpu.memory_space<vmem>>, vector<2x8xf32>,
    return
  }
  func.func @transform_0(%arg0: i32) -> (i32, i32, i32) {
    %c0_i32 = arith.constant 0 : i32
    %c0_i32_0 = arith.constant 0 : i32
    %c0_i32_1 = arith.constant 0 : i32
    return %arg0, %c0_i32, %c0_i32_0 : i32, i32, i32
  }
  func.func @transform_1(%arg0: i32) -> (i32, i32) {
    %c0_i32 = arith.constant 0 : i32
    %c0_i32_0 = arith.constant 0 : i32
    return %arg0, %c0_i32 : i32, i32
  }
  func.func @transform_2(%arg0: i32) -> (i32, i32) {
    %c0_i32 = arith.constant 0 : i32
    %c0_i32_0 = arith.constant 0 : i32
    return %arg0, %c0_i32 : i32, i32
  }
  func.func @transform_3(%arg0: i32) -> (i32, i32, i32) {
    %c0_i32 = arith.constant 0 : i32
    %c0_i32_0 = arith.constant 0 : i32
    %c0_i32_1 = arith.constant 0 : i32
    %c0_i32_2 = arith.constant 0 : i32
    return %c0_i32, %c0_i32_0, %c0_i32_1 : i32, i32, i32
  }
  func.func @transform_4(%arg0: i32) -> (i32, i32) {
    %c0_i32 = arith.constant 0 : i32
    %c0_i32_0 = arith.constant 0 : i32
    return %arg0, %c0_i32 : i32, i32
  }
}

</mosaic_0001>

<llo_original>
// kernel: tpu_custom_call.1
$region0: #{tpu_custom_call.1}
  #allocation0 [shape = 'u32[]', space=smem, size = 0x4, offset = 0x4, fixed_abs, tag = 'smem constant byte address 0x4 - core index']
  #allocation1 [shape = 'u32[144,128]{1,0:T(1,128)}', space=vmem, size = 0x12000, scoped, tag = 'internal scratch']
  %s0 = inlined_call_operand.hbm [shape: f32[2,8,32], index: 0, kind: input, shape index: {}]
  %s1 = inlined_call_operand.hbm [shape: f32[2,8], index: 1, kind: input, shape index: {}]
  %s2 = inlined_call_operand.vmem [shape: f32[2,1], index: 2, kind: input, shape index: {}]
  %s3 = inlined_call_operand.vmem [shape: f32[1,8,32], index: 3, kind: input, shape index: {}]
  %s4 = inlined_call_operand.hbm [shape: f32[2,8], index: 4, kind: output, shape index: {}]
  %s5 = sld [smem:[#allocation0]]
  $region34: #{tpu_custom_call.1} parent=0
    _
  %s7 = ssub.s32 1, %s5
  %s8 = scalar_select 0, %s7, %s5
  $region1: #{tpu_custom_call.1} parent=0
    #allocation2 [shape = 'u8[8192]{0}', space=vmem, size = 0x2000, scoped, tag = 'input window, operand 0, single buffered']
    #allocation3 [shape = 's32[1]{0}', space=sflag, size = 0x4, scoped, tag = 'scoped memory for tpu_custom_call.1']
    #allocation4 [shape = 's32[1]{0}', space=sflag, size = 0x4, scoped, tag = 'scoped memory for tpu_custom_call.1']
    #allocation5 [shape = 'u8[1024]{0}', space=vmem, size = 0x400, scoped, tag = 'input window, operand 1, single buffered']
    #allocation6 [shape = 's32[1]{0}', space=sflag, size = 0x4, scoped, tag = 'scoped memory for tpu_custom_call.1']
    #allocation7 [shape = 'u8[1024]{0}', space=vmem, size = 0x400, scoped, tag = 'output window, operand 0, single buffered']
    %9 = vsyncpa [#allocation3], 0
    %10 = vsyncpa [#allocation6], 0
    %11 = vsyncpa [#allocation4], 0
    // Predicated region
    $region2: #{tpu_custom_call.1} parent=1 // pred_check
      _
    $region3: #{tpu_custom_call.1} parent=1 // pred_check_branch
      %13 = sbr.rel (0) target = $region5
    $region4: #{tpu_custom_call.1} parent=1 // pred_region
      %s15 = ssub.s32 256, 256
      %16 = vsyncadd [#allocation3], %s15
      %s17 = sshll.u32 [#allocation2], 4
      %s18 = int_to_ptr.vmem [resolvable:$true] %s17
      %23 = dma.hbm_to_vmem [thread:$0]  %s0, 256, %s18, [#allocation3], 128, 128, 8
    $region5: #{tpu_custom_call.1} parent=1 // pred_fallthru
      _
    // Predicated region
    $region6: #{tpu_custom_call.1} parent=1 // pred_check
      _
    $region7: #{tpu_custom_call.1} parent=1 // pred_check_branch
      %25 = sbr.rel (0) target = $region9
    $region8: #{tpu_custom_call.1} parent=1 // pred_region
      %s27 = ssub.s32 32, 32
      %28 = vsyncadd [#allocation6], %s27
      %s30 = sshll.u32 [#allocation5], 4
      %s31 = int_to_ptr.vmem [resolvable:$true] %s30
      %33 = dma.hbm_to_vmem [thread:$0]  %s1, 32, %s31, [#allocation6]
    $region9: #{tpu_custom_call.1} parent=1 // pred_fallthru
      _
    // Predicated region
    $region10: #{tpu_custom_call.1} parent=1 // pred_check
      _
    $region11: #{tpu_custom_call.1} parent=1 // pred_check_branch
      %35 = sbr.rel (0) target = $region13
    $region12: #{tpu_custom_call.1} parent=1 // pred_region
      _
    $region13: #{tpu_custom_call.1} parent=1 // pred_fallthru
      _
    // Predicated region
    $region14: #{tpu_custom_call.1} parent=1 // pred_check
      _
    $region15: #{tpu_custom_call.1} parent=1 // pred_check_branch
      %37 = sbr.rel (0) target = $region17
    $region16: #{tpu_custom_call.1} parent=1 // pred_region
      _
    $region17: #{tpu_custom_call.1} parent=1 // pred_fallthru
      _
    // Predicated region
    $region18: #{tpu_custom_call.1} parent=1 // pred_check
      _
    $region19: #{tpu_custom_call.1} parent=1 // pred_check_branch
      %39 = sbr.rel (0) target = $region21
    $region20: #{tpu_custom_call.1} parent=1 // pred_region
      %40 = dma.done [#allocation3], 256
    $region21: #{tpu_custom_call.1} parent=1 // pred_fallthru
      _
    // Predicated region
    $region22: #{tpu_custom_call.1} parent=1 // pred_check
      _
    $region23: #{tpu_custom_call.1} parent=1 // pred_check_branch
      %42 = sbr.rel (0) target = $region25
    $region24: #{tpu_custom_call.1} parent=1 // pred_region
      %43 = dma.done [#allocation6], 32
    $region25: #{tpu_custom_call.1} parent=1 // pred_fallthru
      _
    %v44 = vld [vmem:[#allocation2] sm:$0xff]
    %v45 = vld [vmem:[#allocation2 + $0x8] sm:$0xff]
    %v46 = vld [vmem:[#allocation5] sm:$0x3]
    %v47 = vld [vmem:[%s2] sm:$0x3]
    %v48 = vld [vmem:[%s3] sm:$0xff]
    %v49 = vlaneseq
    %v50 = vshrl.u32 %v49, 7
    %v51 = vsub.s32 0, %v50
    %v52 = vrot.slane %v48, %v51
    %v53 = vmul.f32 %v44, %v52
    %v54 = vmul.f32 %v45, %v52
    %vm55 = vcmask 261120
    %v56 = vsel %vm55, %v53, 0.0
    %57 = vadd.xlane.f32.xlu0 %v56
    %v58 = vpop.xlane.xlu0 %57
    %v59 = vsel %vm55, %v54, 0.0
    %60 = vadd.xlane.f32.xlu0 %v59
    %v61 = vpop.xlane.xlu0 %60
    %63 = vset.pattern.permute.xlu0 0
    %64 = vperm.xlu0 %63, %v47
    %v65 = vpop.permute.xlu0 %64
    %v66 = vlaneseq
    %v67 = vshrl.u32 %v66, 7
    %v68 = vsub.s32 0, %v67
    %v69 = vrot.slane %v65, %v68
    %v70 = vlaneseq
    %v71 = vshrl.u32 %v70, 7
    %v72 = vsub.s32 1, %v71
    %v73 = vrot.slane %v65, %v72
    %v76 = vadd.f32 %v58, %v69
    %v77 = vadd.f32 %v61, %v73
    %v78 = vtanh.pop %v76
    %v79 = vtanh.pop %v77
    %v80 = vsub.f32 1.0, %v46
    %v81 = vmul.f32 %v80, -1e+11
    %v83 = vlaneseq
    %v84 = vshrl.u32 %v83, 7
    %v85 = vsub.s32 0, %v84
    %v86 = vrot.slane %v81, %v85
    %88 = vbcast.lane.b32.xlu0 %v86, 256
    %v89 = vpop.permute.xlu0 %88
    %v90 = vlaneseq
    %v91 = vshrl.u32 %v90, 7
    %v92 = vsub.s32 1, %v91
    %v93 = vrot.slane %v81, %v92
    %95 = vbcast.lane.b32.xlu0 %v93, 256
    %v96 = vpop.permute.xlu0 %95
    %v99 = vadd.f32 %v78, %v89
    %v100 = vadd.f32 %v79, %v96
    %103 = vset.pattern.permute.xlu0 0
    %104 = vperm.xlu0 %103, %v99
    %v105 = vpop.permute.xlu0 %104
    %106 = vset.pattern.permute.xlu0 0
    %107 = vperm.xlu0 %106, %v100
    %v108 = vpop.permute.xlu0 %107
    %v109 = vlaneseq
    %v110 = vand.u32 %v109, 127
    %v111 = vlaneseq
    %v112 = vshrl.u32 %v111, 7
    %v113 = vsub.s32 %v110, %v112
    %v114 = vrot.slane %v105, %v113
    %v115 = vlaneseq
    %v116 = vshrl.u32 %v115, 7
    %v117 = vsub.s32 %v110, %v116
    %v118 = vrot.slane %v108, %v117
    %vm119 = vcmask 1041409
    %v120 = vsel %vm119, %v118, %v114
    %vm122 = vcmask 58368
    %v123 = vsel %vm122, %v120, -inf
    %124 = vmax.xlane.f32.xlu0 %v123
    %v125 = vpop.xlane.xlu0 %124
    %v127 = vlaneseq
    %v128 = vshrl.u32 %v127, 7
    %v129 = vsub.s32 0, %v128
    %v130 = vrot.slane %v125, %v129
    %v131 = vlaneseq
    %v132 = vshrl.u32 %v131, 7
    %v133 = vsub.s32 1, %v132
    %v134 = vrot.slane %v125, %v133
    %v137 = vsub.f32 %v99, %v130
    %v138 = vsub.f32 %v100, %v134
    %v139 = vmul.f32 %v137, 1.442695
    %v140 = vpow.pop %v139
    %v141 = vmul.f32 %v138, 1.442695
    %v142 = vpow.pop %v141
    %145 = vset.pattern.permute.xlu0 0
    %146 = vperm.xlu0 %145, %v140
    %v147 = vpop.permute.xlu0 %146
    %148 = vset.pattern.permute.xlu0 0
    %149 = vperm.xlu0 %148, %v142
    %v150 = vpop.permute.xlu0 %149
    %v151 = vlaneseq
    %v152 = vshrl.u32 %v151, 7
    %v153 = vsub.s32 %v110, %v152
    %v154 = vrot.slane %v147, %v153
    %v155 = vlaneseq
    %v156 = vshrl.u32 %v155, 7
    %v157 = vsub.s32 %v110, %v156
    %v158 = vrot.slane %v150, %v157
    %v159 = vsel %vm119, %v158, %v154
    %v161 = vsel %vm122, %v159, 0.0
    %162 = vadd.xlane.f32.xlu0 %v161
    %v163 = vpop.xlane.xlu0 %162
    %v165 = vlaneseq
    %v166 = vshrl.u32 %v165, 7
    %v167 = vsub.s32 0, %v166
    %v168 = vrot.slane %v163, %v167
    %v169 = vlaneseq
    %v170 = vshrl.u32 %v169, 7
    %v171 = vsub.s32 1, %v170
    %v172 = vrot.slane %v163, %v171
    %v175 = vrcp.pop %v168
    %v176 = vmul.f32 %v140, %v175
    %v177 = vrcp.pop %v172
    %v178 = vmul.f32 %v142, %v177
    %181 = vset.pattern.permute.xlu0 0
    %182 = vperm.xlu0 %181, %v176
    %v183 = vpop.permute.xlu0 %182
    %184 = vset.pattern.permute.xlu0 0
    %185 = vperm.xlu0 %184, %v178
    %v186 = vpop.permute.xlu0 %185
    %v187 = vlaneseq
    %v188 = vshrl.u32 %v187, 7
    %v189 = vsub.s32 %v110, %v188
    %v190 = vrot.slane %v183, %v189
    %v191 = vlaneseq
    %v192 = vshrl.u32 %v191, 7
    %v193 = vsub.s32 %v110, %v192
    %v194 = vrot.slane %v186, %v193
    %v195 = vsel %vm119, %v194, %v190
    %197 = vst.msk [vmem:[#allocation7] sm:$0x3] %vm122, %v195
    // Predicated region
    $region26: #{tpu_custom_call.1} parent=1 // pred_check
      _
    $region27: #{tpu_custom_call.1} parent=1 // pred_check_branch
      %199 = sbr.rel (0) target = $region29
    $region28: #{tpu_custom_call.1} parent=1 // pred_region
      %s201 = ssub.s32 32, 32
      %202 = vsyncadd [#allocation4], %s201
      %s204 = sshll.u32 [#allocation7], 4
      %s205 = int_to_ptr.vmem [resolvable:$true] %s204
      %207 = dma.vmem_to_hbm [thread:$0]  %s205, 32, %s4, [#allocation4]
    $region29: #{tpu_custom_call.1} parent=1 // pred_fallthru
      _
    // Predicated region
    $region30: #{tpu_custom_call.1} parent=1 // pred_check
      _
    $region31: #{tpu_custom_call.1} parent=1 // pred_check_branch
      %209 = sbr.rel (0) target = $region33
    $region32: #{tpu_custom_call.1} parent=1 // pred_region
      %210 = dma.done [#allocation4], 32
    $region33: #{tpu_custom_call.1} parent=1 // pred_fallthru
      _
    %211 = vsyncpa [#allocation3], 1
    %212 = vsyncpa [#allocation6], 1
    %213 = vsyncpa [#allocation4], 1

</llo_original>
